<compile_context>
chip_gen: v7x
topology: tpu7x:2x2x1
jax: 0.10.0
libtpu: 0.0.40
codegen_flags: <defaults>
</compile_context>

<pallas_src>
import jax
import jax.numpy as jnp
from jax.experimental import pallas as pl
from jax.experimental.pallas import tpu as pltpu


def channel_attention(x_nchw, w1, b1, w2, b2, *, max_tb=8, target_block_bytes=4 * 1024 * 1024):
    """x_nchw: (B, C, H, W); w1: (R, C), b1: (R,), w2: (C, R), b2: (C,) (torch Linear layout)."""
    B, C, H, W = x_nchw.shape
    HW = H * W
    R = w1.shape[0]
    itemsize = jnp.dtype(x_nchw.dtype).itemsize

    # Native-layout view: NCHW -> (B, C, HW) is a contiguous collapse (no HBM copy).
    x_bc_hw = x_nchw.reshape(B, C, HW)

    # torch Linear layout -> matmul-ready (tiny host-side transposes).
    w1t = w1.T                 # (C, R)
    w2t = w2.T                 # (R, C)
    b1r = b1.reshape(1, R)
    b2r = b2.reshape(1, C)

    # ---- tiling ----
    # Batch tile: largest divisor of B that is <= max_tb (sublane-dense output stores).
    tb = 1
    for cand in range(min(B, max_tb), 0, -1):
        if B % cand == 0:
            tb = cand
            break

    # HW tile: full extent if it fits the per-block byte budget, else the largest
    # multiple of 128 that divides HW and fits the budget (keeps VMEM bounded,
    # important for v7x's 64 MiB VMEM).
    max_hw_elems = max(128, target_block_bytes // max(1, tb * C * itemsize))
    if HW <= max_hw_elems:
        hw_tile = HW
    else:
        hw_tile = HW  # fallback: single block (correct, possibly large)
        limit = (max_hw_elems // 128) * 128
        for cand in range(limit, 0, -128):
            if HW % cand == 0:
                hw_tile = cand
                break
    n_hw = HW // hw_tile
    inv_hw = 1.0 / float(HW)

    def kernel(x_ref, w1_ref, b1_ref, w2_ref, b2_ref, o_ref, sum_sc, max_sc):
        t = pl.program_id(1)

        @pl.when(t == 0)
        def _():
            sum_sc[...] = jnp.zeros_like(sum_sc)
            max_sc[...] = jnp.full_like(max_sc, -jnp.inf)

        x = x_ref[...].astype(jnp.float32)                        # (TB, C, hw_tile)
        sum_sc[...] += jnp.sum(x, axis=-1)                        # running sum (TB, C)
        max_sc[...] = jnp.maximum(max_sc[...], jnp.max(x, axis=-1))

        @pl.when(t == pl.num_programs(1) - 1)
        def _():
            avg = sum_sc[...] * inv_hw                            # (TB, C), divide by true HW
            mx = max_sc[...]                                      # (TB, C)
            stacked = jnp.concatenate([avg, mx], axis=0)          # (2*TB, C): one shared-MLP pass
            h = jnp.dot(stacked, w1_ref[...],
                        preferred_element_type=jnp.float32) + b1_ref[...]
            h = jnp.maximum(h, 0.0)
            y = jnp.dot(h, w2_ref[...],
                        preferred_element_type=jnp.float32) + b2_ref[...]
            out = jax.nn.sigmoid(y[:tb] + y[tb:])                 # (TB, C)
            o_ref[...] = out.astype(o_ref.dtype)

    block_bytes = tb * C * hw_tile * itemsize
    vmem_limit = int(min(64 * 1024 * 1024,
                         max(16 * 1024 * 1024, 4 * block_bytes + 4 * 1024 * 1024)))
    cost = pl.CostEstimate(
        flops=2 * B * C * HW + 8 * B * C * R,
        transcendentals=B * C,
        bytes_accessed=B * C * HW * itemsize + B * C * itemsize + (2 * C * R + R + C) * 4,
    )

    return pl.pallas_call(
        kernel,
        out_shape=jax.ShapeDtypeStruct((B, C), x_nchw.dtype),
        grid_spec=pltpu.PrefetchScalarGridSpec(
            num_scalar_prefetch=0,
            grid=(B // tb, n_hw),
            in_specs=[
                pl.BlockSpec((tb, C, hw_tile), lambda b, t: (b, 0, t)),  # native-layout activations
                pl.BlockSpec((C, R), lambda b, t: (0, 0)),               # fc1 weight (grid-invariant)
                pl.BlockSpec((1, R), lambda b, t: (0, 0)),               # fc1 bias
                pl.BlockSpec((R, C), lambda b, t: (0, 0)),               # fc2 weight
                pl.BlockSpec((1, C), lambda b, t: (0, 0)),               # fc2 bias
            ],
            out_specs=pl.BlockSpec((tb, C), lambda b, t: (b, 0)),
            scratch_shapes=[pltpu.VMEM((tb, C), jnp.float32),            # running sum
                            pltpu.VMEM((tb, C), jnp.float32)],           # running max
        ),
        compiler_params=pltpu.CompilerParams(
            dimension_semantics=("parallel", "arbitrary"),
            vmem_limit_bytes=vmem_limit,
        ),
        cost_estimate=cost,
    )(x_bc_hw, w1t, b1r, w2t, b2r)


def channel_attention_ref(x_nchw, w1, b1, w2, b2):
    """Pure-JAX reference mirroring the PyTorch forward."""
    B, C, H, W = x_nchw.shape
    xf = x_nchw.astype(jnp.float32).reshape(B, C, H * W)
    avg = jnp.mean(xf, axis=-1)                      # (B, C)  AdaptiveAvgPool2d(1)
    mx = jnp.max(xf, axis=-1)                        # (B, C)  AdaptiveMaxPool2d(1)

    def fc(v):
        h = jnp.maximum(v @ w1.T + b1, 0.0)
        return h @ w2.T + b2

    return jax.nn.sigmoid(fc(avg) + fc(mx))


if __name__ == "__main__":
    # Module defaults: in_channels=128, reduction_ratio=16 -> reduced_channels=8
    B, C, H, W = 2, 128, 16, 16
    R = max(1, C // 16)

    key = jax.random.PRNGKey(0)
    kx, k1, k2, k3, k4 = jax.random.split(key, 5)

    x = jax.random.normal(kx, (B, C, H, W), dtype=jnp.float32)
    # Deterministic synthetic parameters (torch nn.Linear layout: weight (out, in), bias (out,))
    w1 = 0.05 * jax.random.normal(k1, (R, C), dtype=jnp.float32)
    b1 = 0.05 * jax.random.normal(k2, (R,), dtype=jnp.float32)
    w2 = 0.05 * jax.random.normal(k3, (C, R), dtype=jnp.float32)
    b2 = 0.05 * jax.random.normal(k4, (C,), dtype=jnp.float32)

    out = jax.block_until_ready(channel_attention(x, w1, b1, w2, b2))
    ref = channel_attention_ref(x, w1, b1, w2, b2)

    assert out.shape == (B, C), out.shape
    assert jnp.allclose(out, ref, atol=1e-5, rtol=1e-5), "mismatch vs reference"

    print("KERNEL_OK")
</pallas_src>

<mosaic_0001>
module attributes {stable_mosaic.version = 11 : i64} {
  func.func @kernel(%arg0: i32, %arg1: i32, %arg2: memref<2x128x256xf32, #tpu.memory_space<vmem>>, %arg3: memref<128x8xf32, #tpu.memory_space<vmem>>, %arg4: memref<1x8xf32, #tpu.memory_space<vmem>>, %arg5: memref<8x128xf32, #tpu.memory_space<vmem>>, %arg6: memref<1x128xf32, #tpu.memory_space<vmem>>, %arg7: memref<2x128xf32, #tpu.memory_space<vmem>>, %arg8: memref<2x128xf32, #tpu.memory_space<vmem>>, %arg9: memref<2x128xf32, #tpu.memory_space<vmem>>) attributes {dimension_semantics = [#tpu.dimension_semantics<parallel>, #tpu.dimension_semantics<arbitrary>], iteration_bounds = array<i64: 1, 1>, scalar_prefetch = 0 : i64, scratch_operands = 2 : i64, tpu.core_type = #tpu.core_type<tc>, window_params = [{transform_indices = @transform_0, window_bounds = array<i64: 2, 128, 256>}, {pipeline_mode = #tpu.pipeline_mode<synchronous>, transform_indices = @transform_1, window_bounds = array<i64: 128, 8>}, {pipeline_mode = #tpu.pipeline_mode<synchronous>, transform_indices = @transform_2, window_bounds = array<i64: 1, 8>}, {pipeline_mode = #tpu.pipeline_mode<synchronous>, transform_indices = @transform_3, window_bounds = array<i64: 8, 128>}, {pipeline_mode = #tpu.pipeline_mode<synchronous>, transform_indices = @transform_4, window_bounds = array<i64: 1, 128>}, {transform_indices = @transform_5, window_bounds = array<i64: 2, 128>}]} {
    %c0_i32 = arith.constant 0 : i32
    %0 = arith.cmpi eq, %arg1, %c0_i32 : i32
    %1 = arith.extui %0 : i1 to i32
    %c0_i32_0 = arith.constant 0 : i32
    %2 = arith.cmpi ne, %1, %c0_i32_0 : i32
    scf.if %2 {
      %cst_14 = arith.constant 0.000000e+00 : f32
      %15 = vector.broadcast %cst_14 : f32 to vector<2x128xf32>
      %c0_15 = arith.constant 0 : index
      %c0_16 = arith.constant 0 : index
      %16 = vector.load %arg8[%c0_15, %c0_16] : memref<2x128xf32, #tpu.memory_space<vmem>>, vector<2x128xf32>
      tpu.vector_store %arg8[%c0_15, %c0_16], %15 {strides = array<i32>} : memref<2x128xf32, #tpu.memory_space<vmem>>, vector<2x128xf32>,
      %cst_17 = arith.constant 0xFF800000 : f32
      %17 = vector.broadcast %cst_17 : f32 to vector<2x128xf32>
      %c0_18 = arith.constant 0 : index
      %c0_19 = arith.constant 0 : index
      %18 = vector.load %arg9[%c0_18, %c0_19] : memref<2x128xf32, #tpu.memory_space<vmem>>, vector<2x128xf32>
      tpu.vector_store %arg9[%c0_18, %c0_19], %17 {strides = array<i32>} : memref<2x128xf32, #tpu.memory_space<vmem>>, vector<2x128xf32>,
    } else {
    }
    %c0 = arith.constant 0 : index
    %c0_1 = arith.constant 0 : index
    %c0_2 = arith.constant 0 : index
    %3 = vector.load %arg2[%c0, %c0_1, %c0_2] : memref<2x128x256xf32, #tpu.memory_space<vmem>>, vector<2x128x256xf32>
    %c0_3 = arith.constant 0 : index
    %c0_4 = arith.constant 0 : index
    %4 = vector.load %arg8[%c0_3, %c0_4] : memref<2x128xf32, #tpu.memory_space<vmem>>, vector<2x128xf32>
    %cst = arith.constant dense<0.000000e+00> : vector<2x128xf32>
    %5 = vector.multi_reduction <add>, %3, %cst [2] : vector<2x128x256xf32> to vector<2x128xf32>
    %6 = arith.addf %4, %5 : vector<2x128xf32>
    %c0_5 = arith.constant 0 : index
    %c0_6 = arith.constant 0 : index
    %7 = vector.load %arg8[%c0_5, %c0_6] : memref<2x128xf32, #tpu.memory_space<vmem>>, vector<2x128xf32>
    tpu.vector_store %arg8[%c0_5, %c0_6], %6 {strides = array<i32>} : memref<2x128xf32, #tpu.memory_space<vmem>>, vector<2x128xf32>,
    %c0_7 = arith.constant 0 : index
    %c0_8 = arith.constant 0 : index
    %8 = vector.load %arg9[%c0_7, %c0_8] : memref<2x128xf32, #tpu.memory_space<vmem>>, vector<2x128xf32>
    %cst_9 = arith.constant dense<0xFF800000> : vector<2x128xf32>
    %9 = vector.multi_reduction <maximumf>, %3, %cst_9 [2] : vector<2x128x256xf32> to vector<2x128xf32>
    %10 = arith.maximumf %8, %9 : vector<2x128xf32>
    %c0_10 = arith.constant 0 : index
    %c0_11 = arith.constant 0 : index
    %11 = vector.load %arg9[%c0_10, %c0_11] : memref<2x128xf32, #tpu.memory_space<vmem>>, vector<2x128xf32>
    tpu.vector_store %arg9[%c0_10, %c0_11], %10 {strides = array<i32>} : memref<2x128xf32, #tpu.memory_space<vmem>>, vector<2x128xf32>,
    %c0_i32_12 = arith.constant 0 : i32
    %12 = arith.cmpi eq, %arg1, %c0_i32_12 : i32
    %13 = arith.extui %12 : i1 to i32
    %c0_i32_13 = arith.constant 0 : i32
    %14 = arith.cmpi ne, %13, %c0_i32_13 : i32
    scf.if %14 {
      %c0_14 = arith.constant 0 : index
      %c0_15 = arith.constant 0 : index
      %15 = vector.load %arg8[%c0_14, %c0_15] : memref<2x128xf32, #tpu.memory_space<vmem>>, vector<2x128xf32>
      %cst_16 = arith.constant 3.906250e-03 : f32
      %16 = vector.broadcast %cst_16 : f32 to vector<2x128xf32>
      %17 = arith.mulf %15, %16 : vector<2x128xf32>
      %c0_17 = arith.constant 0 : index
      %c0_18 = arith.constant 0 : index
      %18 = vector.load %arg9[%c0_17, %c0_18] : memref<2x128xf32, #tpu.memory_space<vmem>>, vector<2x128xf32>
      %19 = tpu.concatenate %17, %18 in 0 : vector<2x128xf32>, vector<2x128xf32> -> vector<4x128xf32>
      %c0_19 = arith.constant 0 : index
      %c0_20 = arith.constant 0 : index
      %20 = vector.load %arg3[%c0_19, %c0_20] : memref<128x8xf32, #tpu.memory_space<vmem>>, vector<128x8xf32>
      %cst_21 = arith.constant dense<0.000000e+00> : vector<4x8xf32>
      %21 = tpu.matmul %19, %20, %cst_21 {dimension_numbers = #tpu.dot_dimension_numbers<[1], [0], [0], [1], [0, 0, 1, 1], [], []>} : vector<4x128xf32>, vector<128x8xf32>, vector<4x8xf32> -> vector<4x8xf32>
      %c0_22 = arith.constant 0 : index
      %c0_23 = arith.constant 0 : index
      %22 = vector.load %arg4[%c0_22, %c0_23] : memref<1x8xf32, #tpu.memory_space<vmem>>, vector<1x8xf32>
      %23 = vector.broadcast %22 : vector<1x8xf32> to vector<4x8xf32>
      %24 = arith.addf %21, %23 : vector<4x8xf32>
      %cst_24 = arith.constant 0.000000e+00 : f32
      %25 = vector.broadcast %cst_24 : f32 to vector<4x8xf32>
      %26 = arith.maximumf %24, %25 : vector<4x8xf32>
      %c0_25 = arith.constant 0 : index
      %c0_26 = arith.constant 0 : index
      %27 = vector.load %arg5[%c0_25, %c0_26] : memref<8x128xf32, #tpu.memory_space<vmem>>, vector<8x128xf32>
      %cst_27 = arith.constant dense<0.000000e+00> : vector<4x128xf32>
      %28 = tpu.matmul %26, %27, %cst_27 {dimension_numbers = #tpu.dot_dimension_numbers<[1], [0], [0], [1], [0, 0, 1, 1], [], []>} : vector<4x8xf32>, vector<8x128xf32>, vector<4x128xf32> -> vector<4x128xf32>
      %c0_28 = arith.constant 0 : index
      %c0_29 = arith.constant 0 : index
      %29 = vector.load %arg6[%c0_28, %c0_29] : memref<1x128xf32, #tpu.memory_space<vmem>>, vector<1x128xf32>
      %30 = vector.broadcast %29 : vector<1x128xf32> to vector<4x128xf32>
      %31 = arith.addf %28, %30 : vector<4x128xf32>
      %32 = vector.extract_strided_slice %31 {offsets = [0, 0], sizes = [2, 128], strides = [1, 1]} : vector<4x128xf32> to vector<2x128xf32>
      %33 = vector.extract_strided_slice %31 {offsets = [2, 0], sizes = [2, 128], strides = [1, 1]} : vector<4x128xf32> to vector<2x128xf32>
      %34 = arith.addf %32, %33 : vector<2x128xf32>
      %35 = arith.negf %34 : vector<2x128xf32>
      %36 = math.exp %35 : vector<2x128xf32>
      %cst_30 = arith.constant 1.000000e+00 : f32
      %37 = vector.broadcast %cst_30 : f32 to vector<2x128xf32>
      %38 = arith.addf %37, %36 : vector<2x128xf32>
      %39 = arith.divf %37, %38 : vector<2x128xf32>
      %c0_31 = arith.constant 0 : index
      %c0_32 = arith.constant 0 : index
      %40 = vector.load %arg7[%c0_31, %c0_32] : memref<2x128xf32, #tpu.memory_space<vmem>>, vector<2x128xf32>
      tpu.vector_store %arg7[%c0_31, %c0_32], %39 {strides = array<i32>} : memref<2x128xf32, #tpu.memory_space<vmem>>, vector<2x128xf32>,
    } else {
    }
    return
  }
  func.func @transform_0(%arg0: i32, %arg1: i32) -> (i32, i32, i32) {
    %c0_i32 = arith.constant 0 : i32
    %c0_i32_0 = arith.constant 0 : i32
    return %arg0, %c0_i32, %arg1 : i32, i32, i32
  }
  func.func @transform_1(%arg0: i32, %arg1: i32) -> (i32, i32) {
    %c0_i32 = arith.constant 0 : i32
    %c0_i32_0 = arith.constant 0 : i32
    %c0_i32_1 = arith.constant 0 : i32
    return %c0_i32, %c0_i32_0 : i32, i32
  }
  func.func @transform_2(%arg0: i32, %arg1: i32) -> (i32, i32) {
    %c0_i32 = arith.constant 0 : i32
    %c0_i32_0 = arith.constant 0 : i32
    %c0_i32_1 = arith.constant 0 : i32
    return %c0_i32, %c0_i32_0 : i32, i32
  }
  func.func @transform_3(%arg0: i32, %arg1: i32) -> (i32, i32) {
    %c0_i32 = arith.constant 0 : i32
    %c0_i32_0 = arith.constant 0 : i32
    %c0_i32_1 = arith.constant 0 : i32
    return %c0_i32, %c0_i32_0 : i32, i32
  }
  func.func @transform_4(%arg0: i32, %arg1: i32) -> (i32, i32) {
    %c0_i32 = arith.constant 0 : i32
    %c0_i32_0 = arith.constant 0 : i32
    %c0_i32_1 = arith.constant 0 : i32
    return %c0_i32, %c0_i32_0 : i32, i32
  }
  func.func @transform_5(%arg0: i32, %arg1: i32) -> (i32, i32) {
    %c0_i32 = arith.constant 0 : i32
    %c0_i32_0 = arith.constant 0 : i32
    return %arg0, %c0_i32 : i32, i32
  }
}

</mosaic_0001>

<llo_original>
// kernel: tpu_custom_call.1
$region0: #{tpu_custom_call.1}
  #allocation0 [shape = 'u32[]', space=smem, size = 0x4, offset = 0x4, fixed_abs, tag = 'smem constant byte address 0x4 - core index']
  #allocation1 [shape = 'u32[144,128]{1,0:T(1,128)}', space=vmem, size = 0x12000, scoped, tag = 'internal scratch']
  #allocation2 [shape = 'f32[2,128]{1,0:T(2,128)}', space=vmem, size = 0x400, scoped, tag = 'scratch operand']
  #allocation3 [shape = 'f32[2,128]{1,0:T(2,128)}', space=vmem, size = 0x400, scoped, tag = 'scratch operand']
  %s0 = inlined_call_operand.hbm [shape: f32[2,128,256], index: 0, kind: input, shape index: {}]
  %s1 = inlined_call_operand.vmem [shape: f32[128,8], index: 1, kind: input, shape index: {}]
  %s2 = inlined_call_operand.vmem [shape: f32[1,8], index: 2, kind: input, shape index: {}]
  %s3 = inlined_call_operand.vmem [shape: f32[8,128], index: 3, kind: input, shape index: {}]
  %s4 = inlined_call_operand.vmem [shape: f32[1,128], index: 4, kind: input, shape index: {}]
  %s5 = inlined_call_operand.hbm [shape: f32[2,128], index: 5, kind: output, shape index: {}]
  %s6 = sld [smem:[#allocation0]]
  $region42: #{tpu_custom_call.1} parent=0
    _
  %s8 = ssub.s32 1, %s6
  %s9 = scalar_select 0, %s8, %s6
  $region1: #{tpu_custom_call.1} parent=0
    #allocation4 [shape = 'u8[262144]{0}', space=vmem, size = 0x40000, scoped, tag = 'input window, operand 0, single buffered']
    #allocation5 [shape = 's32[1]{0}', space=sflag, size = 0x4, scoped, tag = 'scoped memory for tpu_custom_call.1']
    #allocation6 [shape = 's32[1]{0}', space=sflag, size = 0x4, scoped, tag = 'scoped memory for tpu_custom_call.1']
    #allocation7 [shape = 'u8[1024]{0}', space=vmem, size = 0x400, scoped, tag = 'output window, operand 0, single buffered']
    %10 = vsyncpa [#allocation5], 0
    %11 = vsyncpa [#allocation6], 0
    // Predicated region
    $region2: #{tpu_custom_call.1} parent=1 // pred_check
      _
    $region3: #{tpu_custom_call.1} parent=1 // pred_check_branch
      %13 = sbr.rel (0) target = $region5
    $region4: #{tpu_custom_call.1} parent=1 // pred_region
      %s15 = ssub.s32 8192, 8192
      %16 = vsyncadd [#allocation5], %s15
      %s17 = sshll.u32 [#allocation4], 4
      %s18 = int_to_ptr.vmem [resolvable:$true] %s17
      %23 = dma.hbm_to_vmem [thread:$0]  %s0, 8192, %s18, [#allocation5], 256, 256, 16
    $region5: #{tpu_custom_call.1} parent=1 // pred_fallthru
      _
    // Predicated region
    $region6: #{tpu_custom_call.1} parent=1 // pred_check
      _
    $region7: #{tpu_custom_call.1} parent=1 // pred_check_branch
      %25 = sbr.rel (0) target = $region9
    $region8: #{tpu_custom_call.1} parent=1 // pred_region
      _
    $region9: #{tpu_custom_call.1} parent=1 // pred_fallthru
      _
    // Predicated region
    $region10: #{tpu_custom_call.1} parent=1 // pred_check
      _
    $region11: #{tpu_custom_call.1} parent=1 // pred_check_branch
      %27 = sbr.rel (0) target = $region13
    $region12: #{tpu_custom_call.1} parent=1 // pred_region
      _
    $region13: #{tpu_custom_call.1} parent=1 // pred_fallthru
      _
    // Predicated region
    $region14: #{tpu_custom_call.1} parent=1 // pred_check
      _
    $region15: #{tpu_custom_call.1} parent=1 // pred_check_branch
      %29 = sbr.rel (0) target = $region17
    $region16: #{tpu_custom_call.1} parent=1 // pred_region
      _
    $region17: #{tpu_custom_call.1} parent=1 // pred_fallthru
      _
    // Predicated region
    $region18: #{tpu_custom_call.1} parent=1 // pred_check
      _
    $region19: #{tpu_custom_call.1} parent=1 // pred_check_branch
      %31 = sbr.rel (0) target = $region21
    $region20: #{tpu_custom_call.1} parent=1 // pred_region
      _
    $region21: #{tpu_custom_call.1} parent=1 // pred_fallthru
      _
    // Predicated region
    $region22: #{tpu_custom_call.1} parent=1 // pred_check
      _
    $region23: #{tpu_custom_call.1} parent=1 // pred_check_branch
      %33 = sbr.rel (0) target = $region25
    $region24: #{tpu_custom_call.1} parent=1 // pred_region
      %34 = dma.done [#allocation5], 8192
    $region25: #{tpu_custom_call.1} parent=1 // pred_fallthru
      _
    %p35 = scmp.eq.s32.totalorder 0, 0
    // Predicated region
    $region26: #{tpu_custom_call.1} parent=1 // pred_check
      %p36 = pneg %p35
    $region27: #{tpu_custom_call.1} parent=1 // pred_check_branch
      %38 = sbr.rel (%p36) target = $region29
    $region28: #{tpu_custom_call.1} parent=1 // pred_region
      %39 = vst [vmem:[#allocation2] sm:$0x3] 0.0
      %40 = vst [vmem:[#allocation3] sm:$0x3] -inf
    $region29: #{tpu_custom_call.1} parent=1 // pred_fallthru
      _
    %v41 = vld [vmem:[#allocation4] sm:$0xff]
    %v42 = vld [vmem:[#allocation4 + $0x8] sm:$0xff]
    %v43 = vld [vmem:[#allocation4 + $0x10] sm:$0xff]
    %v44 = vld [vmem:[#allocation4 + $0x18] sm:$0xff]
    %v45 = vld [vmem:[#allocation4 + $0x20] sm:$0xff]
    %v46 = vld [vmem:[#allocation4 + $0x28] sm:$0xff]
    %v47 = vld [vmem:[#allocation4 + $0x30] sm:$0xff]
    %v48 = vld [vmem:[#allocation4 + $0x38] sm:$0xff]
    %v49 = vld [vmem:[#allocation4 + $0x40] sm:$0xff]
    %v50 = vld [vmem:[#allocation4 + $0x48] sm:$0xff]
    %v51 = vld [vmem:[#allocation4 + $0x50] sm:$0xff]
    %v52 = vld [vmem:[#allocation4 + $0x58] sm:$0xff]
    %v53 = vld [vmem:[#allocation4 + $0x60] sm:$0xff]
    %v54 = vld [vmem:[#allocation4 + $0x68] sm:$0xff]
    %v55 = vld [vmem:[#allocation4 + $0x70] sm:$0xff]
    %v56 = vld [vmem:[#allocation4 + $0x78] sm:$0xff]
    %v57 = vld [vmem:[#allocation4 + $0x80] sm:$0xff]
    %v58 = vld [vmem:[#allocation4 + $0x88] sm:$0xff]
    %v59 = vld [vmem:[#allocation4 + $0x90] sm:$0xff]
    %v60 = vld [vmem:[#allocation4 + $0x98] sm:$0xff]
    %v61 = vld [vmem:[#allocation4 + $0xa0] sm:$0xff]
    %v62 = vld [vmem:[#allocation4 + $0xa8] sm:$0xff]
    %v63 = vld [vmem:[#allocation4 + $0xb0] sm:$0xff]
    %v64 = vld [vmem:[#allocation4 + $0xb8] sm:$0xff]
    %v65 = vld [vmem:[#allocation4 + $0xc0] sm:$0xff]
    %v66 = vld [vmem:[#allocation4 + $0xc8] sm:$0xff]
    %v67 = vld [vmem:[#allocation4 + $0xd0] sm:$0xff]
    %v68 = vld [vmem:[#allocation4 + $0xd8] sm:$0xff]
    %v69 = vld [vmem:[#allocation4 + $0xe0] sm:$0xff]
    %v70 = vld [vmem:[#allocation4 + $0xe8] sm:$0xff]
    %v71 = vld [vmem:[#allocation4 + $0xf0] sm:$0xff]
    %v72 = vld [vmem:[#allocation4 + $0xf8] sm:$0xff]
    %v73 = vld [vmem:[#allocation4 + $0x100] sm:$0xff]
    %v74 = vld [vmem:[#allocation4 + $0x108] sm:$0xff]
    %v75 = vld [vmem:[#allocation4 + $0x110] sm:$0xff]
    %v76 = vld [vmem:[#allocation4 + $0x118] sm:$0xff]
    %v77 = vld [vmem:[#allocation4 + $0x120] sm:$0xff]
    %v78 = vld [vmem:[#allocation4 + $0x128] sm:$0xff]
    %v79 = vld [vmem:[#allocation4 + $0x130] sm:$0xff]
    %v80 = vld [vmem:[#allocation4 + $0x138] sm:$0xff]
    %v81 = vld [vmem:[#allocation4 + $0x140] sm:$0xff]
    %v82 = vld [vmem:[#allocation4 + $0x148] sm:$0xff]
    %v83 = vld [vmem:[#allocation4 + $0x150] sm:$0xff]
    %v84 = vld [vmem:[#allocation4 + $0x158] sm:$0xff]
    %v85 = vld [vmem:[#allocation4 + $0x160] sm:$0xff]
    %v86 = vld [vmem:[#allocation4 + $0x168] sm:$0xff]
    %v87 = vld [vmem:[#allocation4 + $0x170] sm:$0xff]
    %v88 = vld [vmem:[#allocation4 + $0x178] sm:$0xff]
    %v89 = vld [vmem:[#allocation4 + $0x180] sm:$0xff]
    %v90 = vld [vmem:[#allocation4 + $0x188] sm:$0xff]
    %v91 = vld [vmem:[#allocation4 + $0x190] sm:$0xff]
    %v92 = vld [vmem:[#allocation4 + $0x198] sm:$0xff]
    %v93 = vld [vmem:[#allocation4 + $0x1a0] sm:$0xff]
    %v94 = vld [vmem:[#allocation4 + $0x1a8] sm:$0xff]
    %v95 = vld [vmem:[#allocation4 + $0x1b0] sm:$0xff]
    %v96 = vld [vmem:[#allocation4 + $0x1b8] sm:$0xff]
    %v97 = vld [vmem:[#allocation4 + $0x1c0] sm:$0xff]
    %v98 = vld [vmem:[#allocation4 + $0x1c8] sm:$0xff]
    %v99 = vld [vmem:[#allocation4 + $0x1d0] sm:$0xff]
    %v100 = vld [vmem:[#allocation4 + $0x1d8] sm:$0xff]
    %v101 = vld [vmem:[#allocation4 + $0x1e0] sm:$0xff]
    %v102 = vld [vmem:[#allocation4 + $0x1e8] sm:$0xff]
    %v103 = vld [vmem:[#allocation4 + $0x1f0] sm:$0xff]
    %v104 = vld [vmem:[#allocation4 + $0x1f8] sm:$0xff]
    %v105 = vld [vmem:[#allocation2] sm:$0x3]
    %v106 = vadd.f32 %v41, %v42
    %107 = vadd.xlane.f32.xlu0 %v106
    %v108 = vpop.xlane.xlu0 %107
    %v109 = vadd.f32 %v43, %v44
    %110 = vadd.xlane.f32.xlu0 %v109
    %v111 = vpop.xlane.xlu0 %110
    %v112 = vadd.f32 %v45, %v46
    %113 = vadd.xlane.f32.xlu0 %v112
    %v114 = vpop.xlane.xlu0 %113
    %v115 = vadd.f32 %v47, %v48
    %116 = vadd.xlane.f32.xlu0 %v115
    %v117 = vpop.xlane.xlu0 %116
    %v118 = vadd.f32 %v49, %v50
    %119 = vadd.xlane.f32.xlu0 %v118
    %v120 = vpop.xlane.xlu0 %119
    %v121 = vadd.f32 %v51, %v52
    %122 = vadd.xlane.f32.xlu0 %v121
    %v123 = vpop.xlane.xlu0 %122
    %v124 = vadd.f32 %v53, %v54
    %125 = vadd.xlane.f32.xlu0 %v124
    %v126 = vpop.xlane.xlu0 %125
    %v127 = vadd.f32 %v55, %v56
    %128 = vadd.xlane.f32.xlu0 %v127
    %v129 = vpop.xlane.xlu0 %128
    %v130 = vadd.f32 %v57, %v58
    %131 = vadd.xlane.f32.xlu0 %v130
    %v132 = vpop.xlane.xlu0 %131
    %v133 = vadd.f32 %v59, %v60
    %134 = vadd.xlane.f32.xlu0 %v133
    %v135 = vpop.xlane.xlu0 %134
    %v136 = vadd.f32 %v61, %v62
    %137 = vadd.xlane.f32.xlu0 %v136
    %v138 = vpop.xlane.xlu0 %137
    %v139 = vadd.f32 %v63, %v64
    %140 = vadd.xlane.f32.xlu0 %v139
    %v141 = vpop.xlane.xlu0 %140
    %v142 = vadd.f32 %v65, %v66
    %143 = vadd.xlane.f32.xlu0 %v142
    %v144 = vpop.xlane.xlu0 %143
    %v145 = vadd.f32 %v67, %v68
    %146 = vadd.xlane.f32.xlu0 %v145
    %v147 = vpop.xlane.xlu0 %146
    %v148 = vadd.f32 %v69, %v70
    %149 = vadd.xlane.f32.xlu0 %v148
    %v150 = vpop.xlane.xlu0 %149
    %v151 = vadd.f32 %v71, %v72
    %152 = vadd.xlane.f32.xlu0 %v151
    %v153 = vpop.xlane.xlu0 %152
    %v154 = vadd.f32 %v73, %v74
    %155 = vadd.xlane.f32.xlu0 %v154
    %v156 = vpop.xlane.xlu0 %155
    %v157 = vadd.f32 %v75, %v76
    %158 = vadd.xlane.f32.xlu0 %v157
    %v159 = vpop.xlane.xlu0 %158
    %v160 = vadd.f32 %v77, %v78
    %161 = vadd.xlane.f32.xlu0 %v160
    %v162 = vpop.xlane.xlu0 %161
    %v163 = vadd.f32 %v79, %v80
    %164 = vadd.xlane.f32.xlu0 %v163
    %v165 = vpop.xlane.xlu0 %164
    %v166 = vadd.f32 %v81, %v82
    %167 = vadd.xlane.f32.xlu0 %v166
    %v168 = vpop.xlane.xlu0 %167
    %v169 = vadd.f32 %v83, %v84
    %170 = vadd.xlane.f32.xlu0 %v169
    %v171 = vpop.xlane.xlu0 %170
    %v172 = vadd.f32 %v85, %v86
    %173 = vadd.xlane.f32.xlu0 %v172
    %v174 = vpop.xlane.xlu0 %173
    %v175 = vadd.f32 %v87, %v88
    %176 = vadd.xlane.f32.xlu0 %v175
    %v177 = vpop.xlane.xlu0 %176
    %v178 = vadd.f32 %v89, %v90
    %179 = vadd.xlane.f32.xlu0 %v178
    %v180 = vpop.xlane.xlu0 %179
    %v181 = vadd.f32 %v91, %v92
    %182 = vadd.xlane.f32.xlu0 %v181
    %v183 = vpop.xlane.xlu0 %182
    %v184 = vadd.f32 %v93, %v94
    %185 = vadd.xlane.f32.xlu0 %v184
    %v186 = vpop.xlane.xlu0 %185
    %v187 = vadd.f32 %v95, %v96
    %188 = vadd.xlane.f32.xlu0 %v187
    %v189 = vpop.xlane.xlu0 %188
    %v190 = vadd.f32 %v97, %v98
    %191 = vadd.xlane.f32.xlu0 %v190
    %v192 = vpop.xlane.xlu0 %191
    %v193 = vadd.f32 %v99, %v100
    %194 = vadd.xlane.f32.xlu0 %v193
    %v195 = vpop.xlane.xlu0 %194
    %v196 = vadd.f32 %v101, %v102
    %197 = vadd.xlane.f32.xlu0 %v196
    %v198 = vpop.xlane.xlu0 %197
    %v199 = vadd.f32 %v103, %v104
    %200 = vadd.xlane.f32.xlu0 %v199
    %v201 = vpop.xlane.xlu0 %200
    %v234 = vlaneseq
    %v235 = vand.u32 %v234, 127
    %v236 = vlaneseq
    %v237 = vshrl.u32 %v236, 7
    %v238 = vsub.s32 %v235, %v237
    %v239 = vrot.slane %v108, %v238
    %v240 = vadd.s32 %v235, 4294967288
    %v241 = vlaneseq
    %v242 = vshrl.u32 %v241, 7
    %v243 = vsub.s32 %v240, %v242
    %v244 = vrot.slane %v111, %v243
    %vm245 = vcmask 130112
    %v246 = vsel %vm245, %v244, %v239
    %v247 = vadd.s32 %v235, 4294967280
    %v248 = vlaneseq
    %v249 = vshrl.u32 %v248, 7
    %v250 = vsub.s32 %v247, %v249
    %v251 = vrot.slane %v114, %v250
    %vm252 = vcmask 195712
    %v253 = vsel %vm252, %v251, %v246
    %v254 = vadd.s32 %v235, 4294967272
    %v255 = vlaneseq
    %v256 = vshrl.u32 %v255, 7
    %v257 = vsub.s32 %v254, %v256
    %v258 = vrot.slane %v117, %v257
    %vm259 = vcmask 261312
    %v260 = vsel %vm259, %v258, %v253
    %v261 = vadd.s32 %v235, 4294967264
    %v262 = vlaneseq
    %v263 = vshrl.u32 %v262, 7
    %v264 = vsub.s32 %v261, %v263
    %v265 = vrot.slane %v120, %v264
    %vm266 = vcmask 326912
    %v267 = vsel %vm266, %v265, %v260
    %v268 = vadd.s32 %v235, 4294967256
    %v269 = vlaneseq
    %v270 = vshrl.u32 %v269, 7
    %v271 = vsub.s32 %v268, %v270
    %v272 = vrot.slane %v123, %v271
    %vm273 = vcmask 392512
    %v274 = vsel %vm273, %v272, %v267
    %v275 = vadd.s32 %v235, 4294967248
    %v276 = vlaneseq
    %v277 = vshrl.u32 %v276, 7
    %v278 = vsub.s32 %v275, %v277
    %v279 = vrot.slane %v126, %v278
    %vm280 = vcmask 458112
    %v281 = vsel %vm280, %v279, %v274
    %v282 = vadd.s32 %v235, 4294967240
    %v283 = vlaneseq
    %v284 = vshrl.u32 %v283, 7
    %v285 = vsub.s32 %v282, %v284
    %v286 = vrot.slane %v129, %v285
    %vm287 = vcmask 523712
    %v288 = vsel %vm287, %v286, %v281
    %v289 = vadd.s32 %v235, 4294967232
    %v290 = vlaneseq
    %v291 = vshrl.u32 %v290, 7
    %v292 = vsub.s32 %v289, %v291
    %v293 = vrot.slane %v132, %v292
    %vm294 = vcmask 589312
    %v295 = vsel %vm294, %v293, %v288
    %v296 = vadd.s32 %v235, 4294967224
    %v297 = vlaneseq
    %v298 = vshrl.u32 %v297, 7
    %v299 = vsub.s32 %v296, %v298
    %v300 = vrot.slane %v135, %v299
    %vm301 = vcmask 654912
    %v302 = vsel %vm301, %v300, %v295
    %v303 = vadd.s32 %v235, 4294967216
    %v304 = vlaneseq
    %v305 = vshrl.u32 %v304, 7
    %v306 = vsub.s32 %v303, %v305
    %v307 = vrot.slane %v138, %v306
    %vm308 = vcmask 720512
    %v309 = vsel %vm308, %v307, %v302
    %v310 = vadd.s32 %v235, 4294967208
    %v311 = vlaneseq
    %v312 = vshrl.u32 %v311, 7
    %v313 = vsub.s32 %v310, %v312
    %v314 = vrot.slane %v141, %v313
    %vm315 = vcmask 786112
    %v316 = vsel %vm315, %v314, %v309
    %v317 = vadd.s32 %v235, 4294967200
    %v318 = vlaneseq
    %v319 = vshrl.u32 %v318, 7
    %v320 = vsub.s32 %v317, %v319
    %v321 = vrot.slane %v144, %v320
    %vm322 = vcmask 851712
    %v323 = vsel %vm322, %v321, %v316
    %v324 = vadd.s32 %v235, 4294967192
    %v325 = vlaneseq
    %v326 = vshrl.u32 %v325, 7
    %v327 = vsub.s32 %v324, %v326
    %v328 = vrot.slane %v147, %v327
    %vm329 = vcmask 917312
    %v330 = vsel %vm329, %v328, %v323
    %v331 = vadd.s32 %v235, 4294967184
    %v332 = vlaneseq
    %v333 = vshrl.u32 %v332, 7
    %v334 = vsub.s32 %v331, %v333
    %v335 = vrot.slane %v150, %v334
    %vm336 = vcmask 982912
    %v337 = vsel %vm336, %v335, %v330
    %v338 = vadd.s32 %v235, 4294967176
    %v339 = vlaneseq
    %v340 = vshrl.u32 %v339, 7
    %v341 = vsub.s32 %v338, %v340
    %v342 = vrot.slane %v153, %v341
    %vm343 = vcmask 1048512
    %v344 = vsel %vm343, %v342, %v337
    %v345 = vlaneseq
    %v346 = vshrl.u32 %v345, 7
    %v347 = vsub.s32 %v235, %v346
    %v348 = vrot.slane %v156, %v347
    %v349 = vlaneseq
    %v350 = vshrl.u32 %v349, 7
    %v351 = vsub.s32 %v240, %v350
    %v352 = vrot.slane %v159, %v351
    %v353 = vsel %vm245, %v352, %v348
    %v354 = vlaneseq
    %v355 = vshrl.u32 %v354, 7
    %v356 = vsub.s32 %v247, %v355
    %v357 = vrot.slane %v162, %v356
    %v358 = vsel %vm252, %v357, %v353
    %v359 = vlaneseq
    %v360 = vshrl.u32 %v359, 7
    %v361 = vsub.s32 %v254, %v360
    %v362 = vrot.slane %v165, %v361
    %v363 = vsel %vm259, %v362, %v358
    %v364 = vlaneseq
    %v365 = vshrl.u32 %v364, 7
    %v366 = vsub.s32 %v261, %v365
    %v367 = vrot.slane %v168, %v366
    %v368 = vsel %vm266, %v367, %v363
    %v369 = vlaneseq
    %v370 = vshrl.u32 %v369, 7
    %v371 = vsub.s32 %v268, %v370
    %v372 = vrot.slane %v171, %v371
    %v373 = vsel %vm273, %v372, %v368
    %v374 = vlaneseq
    %v375 = vshrl.u32 %v374, 7
    %v376 = vsub.s32 %v275, %v375
    %v377 = vrot.slane %v174, %v376
    %v378 = vsel %vm280, %v377, %v373
    %v379 = vlaneseq
    %v380 = vshrl.u32 %v379, 7
    %v381 = vsub.s32 %v282, %v380
    %v382 = vrot.slane %v177, %v381
    %v383 = vsel %vm287, %v382, %v378
    %v384 = vlaneseq
    %v385 = vshrl.u32 %v384, 7
    %v386 = vsub.s32 %v289, %v385
    %v387 = vrot.slane %v180, %v386
    %v388 = vsel %vm294, %v387, %v383
    %v389 = vlaneseq
    %v390 = vshrl.u32 %v389, 7
    %v391 = vsub.s32 %v296, %v390
    %v392 = vrot.slane %v183, %v391
    %v393 = vsel %vm301, %v392, %v388
    %v394 = vlaneseq
    %v395 = vshrl.u32 %v394, 7
    %v396 = vsub.s32 %v303, %v395
    %v397 = vrot.slane %v186, %v396
    %v398 = vsel %vm308, %v397, %v393
    %v399 = vlaneseq
    %v400 = vshrl.u32 %v399, 7
    %v401 = vsub.s32 %v310, %v400
    %v402 = vrot.slane %v189, %v401
    %v403 = vsel %vm315, %v402, %v398
    %v404 = vlaneseq
    %v405 = vshrl.u32 %v404, 7
    %v406 = vsub.s32 %v317, %v405
    %v407 = vrot.slane %v192, %v406
    %v408 = vsel %vm322, %v407, %v403
    %v409 = vlaneseq
    %v410 = vshrl.u32 %v409, 7
    %v411 = vsub.s32 %v324, %v410
    %v412 = vrot.slane %v195, %v411
    %v413 = vsel %vm329, %v412, %v408
    %v414 = vlaneseq
    %v415 = vshrl.u32 %v414, 7
    %v416 = vsub.s32 %v331, %v415
    %v417 = vrot.slane %v198, %v416
    %v418 = vsel %vm336, %v417, %v413
    %v419 = vlaneseq
    %v420 = vshrl.u32 %v419, 7
    %v421 = vsub.s32 %v338, %v420
    %v422 = vrot.slane %v201, %v421
    %v423 = vsel %vm343, %v422, %v418
    %vm424 = vcmask 1041409
    %v425 = vsel %vm424, %v423, %v344
    %v427 = vadd.f32 %v105, %v425
    %428 = vst [vmem:[#allocation2] sm:$0x3] %v427
    %v429 = vld [vmem:[#allocation3] sm:$0x3]
    %v430 = vmax.f32 %v41, %v42
    %431 = vmax.xlane.f32.xlu0 %v430
    %v432 = vpop.xlane.xlu0 %431
    %v433 = vmax.f32 %v43, %v44
    %434 = vmax.xlane.f32.xlu0 %v433
    %v435 = vpop.xlane.xlu0 %434
    %v436 = vmax.f32 %v45, %v46
    %437 = vmax.xlane.f32.xlu0 %v436
    %v438 = vpop.xlane.xlu0 %437
    %v439 = vmax.f32 %v47, %v48
    %440 = vmax.xlane.f32.xlu0 %v439
    %v441 = vpop.xlane.xlu0 %440
    %v442 = vmax.f32 %v49, %v50
    %443 = vmax.xlane.f32.xlu0 %v442
    %v444 = vpop.xlane.xlu0 %443
    %v445 = vmax.f32 %v51, %v52
    %446 = vmax.xlane.f32.xlu0 %v445
    %v447 = vpop.xlane.xlu0 %446
    %v448 = vmax.f32 %v53, %v54
    %449 = vmax.xlane.f32.xlu0 %v448
    %v450 = vpop.xlane.xlu0 %449
    %v451 = vmax.f32 %v55, %v56
    %452 = vmax.xlane.f32.xlu0 %v451
    %v453 = vpop.xlane.xlu0 %452
    %v454 = vmax.f32 %v57, %v58
    %455 = vmax.xlane.f32.xlu0 %v454
    %v456 = vpop.xlane.xlu0 %455
    %v457 = vmax.f32 %v59, %v60
    %458 = vmax.xlane.f32.xlu0 %v457
    %v459 = vpop.xlane.xlu0 %458
    %v460 = vmax.f32 %v61, %v62
    %461 = vmax.xlane.f32.xlu0 %v460
    %v462 = vpop.xlane.xlu0 %461
    %v463 = vmax.f32 %v63, %v64
    %464 = vmax.xlane.f32.xlu0 %v463
    %v465 = vpop.xlane.xlu0 %464
    %v466 = vmax.f32 %v65, %v66
    %467 = vmax.xlane.f32.xlu0 %v466
    %v468 = vpop.xlane.xlu0 %467
    %v469 = vmax.f32 %v67, %v68
    %470 = vmax.xlane.f32.xlu0 %v469
    %v471 = vpop.xlane.xlu0 %470
    %v472 = vmax.f32 %v69, %v70
    %473 = vmax.xlane.f32.xlu0 %v472
    %v474 = vpop.xlane.xlu0 %473
    %v475 = vmax.f32 %v71, %v72
    %476 = vmax.xlane.f32.xlu0 %v475
    %v477 = vpop.xlane.xlu0 %476
    %v478 = vmax.f32 %v73, %v74
    %479 = vmax.xlane.f32.xlu0 %v478
    %v480 = vpop.xlane.xlu0 %479
    %v481 = vmax.f32 %v75, %v76
    %482 = vmax.xlane.f32.xlu0 %v481
    %v483 = vpop.xlane.xlu0 %482
    %v484 = vmax.f32 %v77, %v78
    %485 = vmax.xlane.f32.xlu0 %v484
    %v486 = vpop.xlane.xlu0 %485
    %v487 = vmax.f32 %v79, %v80
    %488 = vmax.xlane.f32.xlu0 %v487
    %v489 = vpop.xlane.xlu0 %488
    %v490 = vmax.f32 %v81, %v82
    %491 = vmax.xlane.f32.xlu0 %v490
    %v492 = vpop.xlane.xlu0 %491
    %v493 = vmax.f32 %v83, %v84
    %494 = vmax.xlane.f32.xlu0 %v493
    %v495 = vpop.xlane.xlu0 %494
    %v496 = vmax.f32 %v85, %v86
    %497 = vmax.xlane.f32.xlu0 %v496
    %v498 = vpop.xlane.xlu0 %497
    %v499 = vmax.f32 %v87, %v88
    %500 = vmax.xlane.f32.xlu0 %v499
    %v501 = vpop.xlane.xlu0 %500
    %v502 = vmax.f32 %v89, %v90
    %503 = vmax.xlane.f32.xlu0 %v502
    %v504 = vpop.xlane.xlu0 %503
    %v505 = vmax.f32 %v91, %v92
    %506 = vmax.xlane.f32.xlu0 %v505
    %v507 = vpop.xlane.xlu0 %506
    %v508 = vmax.f32 %v93, %v94
    %509 = vmax.xlane.f32.xlu0 %v508
    %v510 = vpop.xlane.xlu0 %509
    %v511 = vmax.f32 %v95, %v96
    %512 = vmax.xlane.f32.xlu0 %v511
    %v513 = vpop.xlane.xlu0 %512
    %v514 = vmax.f32 %v97, %v98
    %515 = vmax.xlane.f32.xlu0 %v514
    %v516 = vpop.xlane.xlu0 %515
    %v517 = vmax.f32 %v99, %v100
    %518 = vmax.xlane.f32.xlu0 %v517
    %v519 = vpop.xlane.xlu0 %518
    %v520 = vmax.f32 %v101, %v102
    %521 = vmax.xlane.f32.xlu0 %v520
    %v522 = vpop.xlane.xlu0 %521
    %v523 = vmax.f32 %v103, %v104
    %524 = vmax.xlane.f32.xlu0 %v523
    %v525 = vpop.xlane.xlu0 %524
    %v558 = vlaneseq
    %v559 = vshrl.u32 %v558, 7
    %v560 = vsub.s32 %v235, %v559
    %v561 = vrot.slane %v432, %v560
    %v562 = vlaneseq
    %v563 = vshrl.u32 %v562, 7
    %v564 = vsub.s32 %v240, %v563
    %v565 = vrot.slane %v435, %v564
    %v566 = vsel %vm245, %v565, %v561
    %v567 = vlaneseq
    %v568 = vshrl.u32 %v567, 7
    %v569 = vsub.s32 %v247, %v568
    %v570 = vrot.slane %v438, %v569
    %v571 = vsel %vm252, %v570, %v566
    %v572 = vlaneseq
    %v573 = vshrl.u32 %v572, 7
    %v574 = vsub.s32 %v254, %v573
    %v575 = vrot.slane %v441, %v574
    %v576 = vsel %vm259, %v575, %v571
    %v577 = vlaneseq
    %v578 = vshrl.u32 %v577, 7
    %v579 = vsub.s32 %v261, %v578
    %v580 = vrot.slane %v444, %v579
    %v581 = vsel %vm266, %v580, %v576
    %v582 = vlaneseq
    %v583 = vshrl.u32 %v582, 7
    %v584 = vsub.s32 %v268, %v583
    %v585 = vrot.slane %v447, %v584
    %v586 = vsel %vm273, %v585, %v581
    %v587 = vlaneseq
    %v588 = vshrl.u32 %v587, 7
    %v589 = vsub.s32 %v275, %v588
    %v590 = vrot.slane %v450, %v589
    %v591 = vsel %vm280, %v590, %v586
    %v592 = vlaneseq
    %v593 = vshrl.u32 %v592, 7
    %v594 = vsub.s32 %v282, %v593
    %v595 = vrot.slane %v453, %v594
    %v596 = vsel %vm287, %v595, %v591
    %v597 = vlaneseq
    %v598 = vshrl.u32 %v597, 7
    %v599 = vsub.s32 %v289, %v598
    %v600 = vrot.slane %v456, %v599
    %v601 = vsel %vm294, %v600, %v596
    %v602 = vlaneseq
    %v603 = vshrl.u32 %v602, 7
    %v604 = vsub.s32 %v296, %v603
    %v605 = vrot.slane %v459, %v604
    %v606 = vsel %vm301, %v605, %v601
    %v607 = vlaneseq
    %v608 = vshrl.u32 %v607, 7
    %v609 = vsub.s32 %v303, %v608
    %v610 = vrot.slane %v462, %v609
    %v611 = vsel %vm308, %v610, %v606
    %v612 = vlaneseq
    %v613 = vshrl.u32 %v612, 7
    %v614 = vsub.s32 %v310, %v613
    %v615 = vrot.slane %v465, %v614
    %v616 = vsel %vm315, %v615, %v611
    %v617 = vlaneseq
    %v618 = vshrl.u32 %v617, 7
    %v619 = vsub.s32 %v317, %v618
    %v620 = vrot.slane %v468, %v619
    %v621 = vsel %vm322, %v620, %v616
    %v622 = vlaneseq
    %v623 = vshrl.u32 %v622, 7
    %v624 = vsub.s32 %v324, %v623
    %v625 = vrot.slane %v471, %v624
    %v626 = vsel %vm329, %v625, %v621
    %v627 = vlaneseq
    %v628 = vshrl.u32 %v627, 7
    %v629 = vsub.s32 %v331, %v628
    %v630 = vrot.slane %v474, %v629
    %v631 = vsel %vm336, %v630, %v626
    %v632 = vlaneseq
    %v633 = vshrl.u32 %v632, 7
    %v634 = vsub.s32 %v338, %v633
    %v635 = vrot.slane %v477, %v634
    %v636 = vsel %vm343, %v635, %v631
    %v637 = vlaneseq
    %v638 = vshrl.u32 %v637, 7
    %v639 = vsub.s32 %v235, %v638
    %v640 = vrot.slane %v480, %v639
    %v641 = vlaneseq
    %v642 = vshrl.u32 %v641, 7
    %v643 = vsub.s32 %v240, %v642
    %v644 = vrot.slane %v483, %v643
    %v645 = vsel %vm245, %v644, %v640
    %v646 = vlaneseq
    %v647 = vshrl.u32 %v646, 7
    %v648 = vsub.s32 %v247, %v647
    %v649 = vrot.slane %v486, %v648
    %v650 = vsel %vm252, %v649, %v645
    %v651 = vlaneseq
    %v652 = vshrl.u32 %v651, 7
    %v653 = vsub.s32 %v254, %v652
    %v654 = vrot.slane %v489, %v653
    %v655 = vsel %vm259, %v654, %v650
    %v656 = vlaneseq
    %v657 = vshrl.u32 %v656, 7
    %v658 = vsub.s32 %v261, %v657
    %v659 = vrot.slane %v492, %v658
    %v660 = vsel %vm266, %v659, %v655
    %v661 = vlaneseq
    %v662 = vshrl.u32 %v661, 7
    %v663 = vsub.s32 %v268, %v662
    %v664 = vrot.slane %v495, %v663
    %v665 = vsel %vm273, %v664, %v660
    %v666 = vlaneseq
    %v667 = vshrl.u32 %v666, 7
    %v668 = vsub.s32 %v275, %v667
    %v669 = vrot.slane %v498, %v668
    %v670 = vsel %vm280, %v669, %v665
    %v671 = vlaneseq
    %v672 = vshrl.u32 %v671, 7
    %v673 = vsub.s32 %v282, %v672
    %v674 = vrot.slane %v501, %v673
    %v675 = vsel %vm287, %v674, %v670
    %v676 = vlaneseq
    %v677 = vshrl.u32 %v676, 7
    %v678 = vsub.s32 %v289, %v677
    %v679 = vrot.slane %v504, %v678
    %v680 = vsel %vm294, %v679, %v675
    %v681 = vlaneseq
    %v682 = vshrl.u32 %v681, 7
    %v683 = vsub.s32 %v296, %v682
    %v684 = vrot.slane %v507, %v683
    %v685 = vsel %vm301, %v684, %v680
    %v686 = vlaneseq
    %v687 = vshrl.u32 %v686, 7
    %v688 = vsub.s32 %v303, %v687
    %v689 = vrot.slane %v510, %v688
    %v690 = vsel %vm308, %v689, %v685
    %v691 = vlaneseq
    %v692 = vshrl.u32 %v691, 7
    %v693 = vsub.s32 %v310, %v692
    %v694 = vrot.slane %v513, %v693
    %v695 = vsel %vm315, %v694, %v690
    %v696 = vlaneseq
    %v697 = vshrl.u32 %v696, 7
    %v698 = vsub.s32 %v317, %v697
    %v699 = vrot.slane %v516, %v698
    %v700 = vsel %vm322, %v699, %v695
    %v701 = vlaneseq
    %v702 = vshrl.u32 %v701, 7
    %v703 = vsub.s32 %v324, %v702
    %v704 = vrot.slane %v519, %v703
    %v705 = vsel %vm329, %v704, %v700
    %v706 = vlaneseq
    %v707 = vshrl.u32 %v706, 7
    %v708 = vsub.s32 %v331, %v707
    %v709 = vrot.slane %v522, %v708
    %v710 = vsel %vm336, %v709, %v705
    %v711 = vlaneseq
    %v712 = vshrl.u32 %v711, 7
    %v713 = vsub.s32 %v338, %v712
    %v714 = vrot.slane %v525, %v713
    %v715 = vsel %vm343, %v714, %v710
    %v716 = vsel %vm424, %v715, %v636
    %v718 = vmax.f32 %v429, %v716
    %719 = vst [vmem:[#allocation3] sm:$0x3] %v718
    // Predicated region
    $region30: #{tpu_custom_call.1} parent=1 // pred_check
      %p720 = pneg %p35
    $region31: #{tpu_custom_call.1} parent=1 // pred_check_branch
      %722 = sbr.rel (%p720) target = $region33
    $region32: #{tpu_custom_call.1} parent=1 // pred_region
      %v723 = vld [vmem:[#allocation2] sm:$0x3]
      %v724 = vmul.f32 %v723, 0.00390625
      %v725 = vld [vmem:[#allocation3] sm:$0x3]
      %v727 = vrot.slane %v725, 6
      %vm729 = vcmask 1041408
      %v730 = vsel %vm729, %v724, %v727
      %v731 = vld [vmem:[%s1] sm:$0xff]
      %v732 = vld [vmem:[%s1 + $0x8] sm:$0xff]
      %v733 = vld [vmem:[%s1 + $0x10] sm:$0xff]
      %v734 = vld [vmem:[%s1 + $0x18] sm:$0xff]
      %v735 = vld [vmem:[%s1 + $0x20] sm:$0xff]
      %v736 = vld [vmem:[%s1 + $0x28] sm:$0xff]
      %v737 = vld [vmem:[%s1 + $0x30] sm:$0xff]
      %v738 = vld [vmem:[%s1 + $0x38] sm:$0xff]
      %v739 = vld [vmem:[%s1 + $0x40] sm:$0xff]
      %v740 = vld [vmem:[%s1 + $0x48] sm:$0xff]
      %v741 = vld [vmem:[%s1 + $0x50] sm:$0xff]
      %v742 = vld [vmem:[%s1 + $0x58] sm:$0xff]
      %v743 = vld [vmem:[%s1 + $0x60] sm:$0xff]
      %v744 = vld [vmem:[%s1 + $0x68] sm:$0xff]
      %v745 = vld [vmem:[%s1 + $0x70] sm:$0xff]
      %v746 = vld [vmem:[%s1 + $0x78] sm:$0xff]
      %v747 = vld [vmem:[%s2] sm:$0x1]
      %v749 = vlaneseq
      %v750 = vshrl.u32 %v749, 7
      %v751 = vsub.s32 0, %v750
      %v752 = vrot.slane %v747, %v751
      %754 = vmatprep.subr.mxu0 0.0
      %755 = vmatpush1.msra.mxu0 %v731
      %756 = vmatprep.subr.mxu0 0.0
      %757 = vmatpush1.msra.mxu0 %v732
      %758 = vmatprep.subr.mxu0 0.0
      %759 = vmatpush1.msra.mxu0 %v733
      %760 = vmatprep.subr.mxu0 0.0
      %761 = vmatpush1.msra.mxu0 %v734
      %762 = vmatprep.subr.mxu0 0.0
      %763 = vmatpush1.msra.mxu0 %v735
      %764 = vmatprep.subr.mxu0 0.0
      %765 = vmatpush1.msra.mxu0 %v736
      %766 = vmatprep.subr.mxu0 0.0
      %767 = vmatpush1.msra.mxu0 %v737
      %768 = vmatprep.subr.mxu0 0.0
      %769 = vmatpush1.msra.mxu0 %v738
      %770 = vmatprep.subr.mxu0 0.0
      %771 = vmatpush1.msra.mxu0 %v739
      %772 = vmatprep.subr.mxu0 0.0
      %773 = vmatpush1.msra.mxu0 %v740
      %774 = vmatprep.subr.mxu0 0.0
      %775 = vmatpush1.msra.mxu0 %v741
      %776 = vmatprep.subr.mxu0 0.0
      %777 = vmatpush1.msra.mxu0 %v742
      %778 = vmatprep.subr.mxu0 0.0
      %779 = vmatpush1.msra.mxu0 %v743
      %780 = vmatprep.subr.mxu0 0.0
      %781 = vmatpush1.msra.mxu0 %v744
      %782 = vmatprep.subr.mxu0 0.0
      %783 = vmatpush1.msra.mxu0 %v745
      %784 = vmatprep.subr.mxu0 0.0
      %785 = vmatpush1.msra.mxu0 %v746
      %786 = vmatprep.subr.mxu0 0.0
      %787 = vmatpush1.msra.mxu0 0.0
      %788 = vmatprep.subr.mxu0 0.0
      %789 = vmatpush1.msra.mxu0 0.0
      %790 = vmatprep.subr.mxu0 0.0
      %791 = vmatpush1.msra.mxu0 0.0
      %792 = vmatprep.subr.mxu0 0.0
      %793 = vmatpush1.msra.mxu0 0.0
      %794 = vmatprep.subr.mxu0 0.0
      %795 = vmatpush1.msra.mxu0 0.0
      %796 = vmatprep.subr.mxu0 0.0
      %797 = vmatpush1.msra.mxu0 0.0
      %798 = vmatprep.subr.mxu0 0.0
      %799 = vmatpush1.msra.mxu0 0.0
      %800 = vmatprep.subr.mxu0 0.0
      %801 = vmatpush1.msra.mxu0 0.0
      %802 = vmatprep.subr.mxu0 0.0
      %803 = vmatpush1.msra.mxu0 0.0
      %804 = vmatprep.subr.mxu0 0.0
      %805 = vmatpush1.msra.mxu0 0.0
      %806 = vmatprep.subr.mxu0 0.0
      %807 = vmatpush1.msra.mxu0 0.0
      %808 = vmatprep.subr.mxu0 0.0
      %809 = vmatpush1.msra.mxu0 0.0
      %810 = vmatprep.subr.mxu0 0.0
      %811 = vmatpush1.msra.mxu0 0.0
      %812 = vmatprep.subr.mxu0 0.0
      %813 = vmatpush1.msra.mxu0 0.0
      %814 = vmatprep.subr.mxu0 0.0
      %815 = vmatpush1.msra.mxu0 0.0
      %816 = vmatprep.subr.mxu0 0.0
      %817 = vmatpush1.msra.mxu0 0.0
      %818 = vmatprep.mubr.f32.mxu0 0.0
      %819 = vmatmul.mubr.f32.gmra.mrb[0].mxu0 %v730
      %v820 = vpop.f32.mrb[0].mxu0
      %v821 = vadd.f32 %v752, %v820
      %v822 = vpop.f32.mrb[0].mxu0
      %823 = vdwg.mxu0
      %v824 = vmax.f32 %v821, 0.0
      %v825 = vld [vmem:[%s3] sm:$0xff]
      %v826 = vld [vmem:[%s4] sm:$0x1]
      %v828 = vlaneseq
      %v829 = vshrl.u32 %v828, 7
      %v830 = vsub.s32 0, %v829
      %v831 = vrot.slane %v826, %v830
      %vm833 = vcmask 64512
      %v835 = vsel %vm833, %v824, 0
      %837 = vmatprep.subr.mxu0 0.0
      %838 = vmatpush1.msra.mxu0 %v825
      %839 = vmatprep.subr.mxu0 0.0
      %840 = vmatpush1.msra.mxu0 0.0
      %841 = vmatprep.subr.mxu0 0.0
      %842 = vmatpush1.msra.mxu0 0.0
      %843 = vmatprep.subr.mxu0 0.0
      %844 = vmatpush1.msra.mxu0 0.0
      %845 = vmatprep.subr.mxu0 0.0
      %846 = vmatpush1.msra.mxu0 0.0
      %847 = vmatprep.subr.mxu0 0.0
      %848 = vmatpush1.msra.mxu0 0.0
      %849 = vmatprep.subr.mxu0 0.0
      %850 = vmatpush1.msra.mxu0 0.0
      %851 = vmatprep.subr.mxu0 0.0
      %852 = vmatpush1.msra.mxu0 0.0
      %853 = vmatprep.subr.mxu0 0.0
      %854 = vmatpush1.msra.mxu0 0.0
      %855 = vmatprep.subr.mxu0 0.0
      %856 = vmatpush1.msra.mxu0 0.0
      %857 = vmatprep.subr.mxu0 0.0
      %858 = vmatpush1.msra.mxu0 0.0
      %859 = vmatprep.subr.mxu0 0.0
      %860 = vmatpush1.msra.mxu0 0.0
      %861 = vmatprep.subr.mxu0 0.0
      %862 = vmatpush1.msra.mxu0 0.0
      %863 = vmatprep.subr.mxu0 0.0
      %864 = vmatpush1.msra.mxu0 0.0
      %865 = vmatprep.subr.mxu0 0.0
      %866 = vmatpush1.msra.mxu0 0.0
      %867 = vmatprep.subr.mxu0 0.0
      %868 = vmatpush1.msra.mxu0 0.0
      %869 = vmatprep.subr.mxu0 0.0
      %870 = vmatpush1.msra.mxu0 0.0
      %871 = vmatprep.subr.mxu0 0.0
      %872 = vmatpush1.msra.mxu0 0.0
      %873 = vmatprep.subr.mxu0 0.0
      %874 = vmatpush1.msra.mxu0 0.0
      %875 = vmatprep.subr.mxu0 0.0
      %876 = vmatpush1.msra.mxu0 0.0
      %877 = vmatprep.subr.mxu0 0.0
      %878 = vmatpush1.msra.mxu0 0.0
      %879 = vmatprep.subr.mxu0 0.0
      %880 = vmatpush1.msra.mxu0 0.0
      %881 = vmatprep.subr.mxu0 0.0
      %882 = vmatpush1.msra.mxu0 0.0
      %883 = vmatprep.subr.mxu0 0.0
      %884 = vmatpush1.msra.mxu0 0.0
      %885 = vmatprep.subr.mxu0 0.0
      %886 = vmatpush1.msra.mxu0 0.0
      %887 = vmatprep.subr.mxu0 0.0
      %888 = vmatpush1.msra.mxu0 0.0
      %889 = vmatprep.subr.mxu0 0.0
      %890 = vmatpush1.msra.mxu0 0.0
      %891 = vmatprep.subr.mxu0 0.0
      %892 = vmatpush1.msra.mxu0 0.0
      %893 = vmatprep.subr.mxu0 0.0
      %894 = vmatpush1.msra.mxu0 0.0
      %895 = vmatprep.subr.mxu0 0.0
      %896 = vmatpush1.msra.mxu0 0.0
      %897 = vmatprep.subr.mxu0 0.0
      %898 = vmatpush1.msra.mxu0 0.0
      %899 = vmatprep.subr.mxu0 0.0
      %900 = vmatpush1.msra.mxu0 0.0
      %901 = vmatprep.mubr.f32.mxu0 0.0
      %902 = vmatmul.mubr.f32.gmra.mrb[0].mxu0 %v835
      %v903 = vpop.f32.mrb[0].mxu0
      %v904 = vadd.f32 %v831, %v903
      %v905 = vpop.f32.mrb[0].mxu0
      %906 = vdwg.mxu0
      %v908 = vrot.slane %v904, 2
      %v910 = vadd.f32 %v904, %v908
      %v911 = vxor.u32 %v910, 2147483648
      %v912 = vmul.f32 %v911, 1.442695
      %v913 = vpow.pop %v912
      %v914 = vadd.f32 %v913, 1.0
      %v915 = vrcp.pop %v914
      %v916 = vmul.f32 1.0, %v915
      %917 = vst [vmem:[#allocation7] sm:$0x3] %v916
    $region33: #{tpu_custom_call.1} parent=1 // pred_fallthru
      _
    // Predicated region
    $region34: #{tpu_custom_call.1} parent=1 // pred_check
      _
    $region35: #{tpu_custom_call.1} parent=1 // pred_check_branch
      %919 = sbr.rel (0) target = $region37
    $region36: #{tpu_custom_call.1} parent=1 // pred_region
      %s921 = ssub.s32 32, 32
      %922 = vsyncadd [#allocation6], %s921
      %s924 = sshll.u32 [#allocation7], 4
      %s925 = int_to_ptr.vmem [resolvable:$true] %s924
      %927 = dma.vmem_to_hbm [thread:$0]  %s925, 32, %s5, [#allocation6]
    $region37: #{tpu_custom_call.1} parent=1 // pred_fallthru
      _
    // Predicated region
    $region38: #{tpu_custom_call.1} parent=1 // pred_check
      _
    $region39: #{tpu_custom_call.1} parent=1 // pred_check_branch
      %929 = sbr.rel (0) target = $region41
    $region40: #{tpu_custom_call.1} parent=1 // pred_region
      %930 = dma.done [#allocation6], 32
    $region41: #{tpu_custom_call.1} parent=1 // pred_fallthru
      _
    %931 = vsyncpa [#allocation5], 1
    %932 = vsyncpa [#allocation6], 1

</llo_original>
